<compile_context>
chip_gen: v6e
topology: v6e:2x2x1
jax: 0.10.0
libtpu: 0.0.40
codegen_flags: <defaults>
</compile_context>

<pallas_src>
import jax
import jax.numpy as jnp
from jax.experimental import pallas as pl
from jax.experimental.pallas import tpu as pltpu

# ----------------------------- configuration --------------------------------
D_MODEL   = 32          # encoder hidden size
D_H       = 32          # decoder hidden size
D_HH      = 64          # decoder FFN hidden size
N_HEAD    = 4           # interface parity only (single-token attention)
N_LAYER   = 2
N_LABEL   = 16
MAX_DEPTH = 3
VOCAB     = 50
LN_EPS    = 1e-5
LANES     = 128
NEG       = -1e9

# packed-slab layout -----------------------------------------------------------
#   wmat (WMAT_ROWS, 128): rows 0:32 = Wc (classifier, padded to 128 lanes);
#       per layer l at rb = 32 + 128*l: Wto (32 rows), W1 (32), W2 (64)
#   bvec (BVEC_ROWS, 128): row 0 = bc (128-lane padded); per layer 8 rows:
#       bto, ln0_g, ln0_b, b1, b2, ln1_g, ln1_b, (spare)
#   tabs (256, 128): rows 0:128 = label-embedding table (rows 0:16 used),
#       rows 128:256 = additive label-graph mask table (rows 128:144 used,
#       lanes 16:127 of those rows forced to -1e9)
WMAT_ROWS  = 32 + 128 * N_LAYER
BVEC_ROWS  = -(-(1 + 8 * N_LAYER) // 8) * 8
TABS_ROWS  = 2 * LANES
TILE_B_MAX = 2048


def _layernorm(x, g, b):
    mu = jnp.mean(x, axis=-1, keepdims=True)
    var = jnp.mean((x - mu) ** 2, axis=-1, keepdims=True)
    return (x - mu) * jax.lax.rsqrt(var + LN_EPS) * g + b


# ------------------------------ kernel helpers --------------------------------
def _fold_attn(e, wmat_ref, bvec_ref):
    """Depth-invariant folded attention output per layer (computed once/tile)."""
    o_layers = []
    for l in range(N_LAYER):
        rb = 32 + 128 * l
        bb = 1 + 8 * l
        o_layers.append(
            jnp.dot(e, wmat_ref[rb:rb + D_MODEL, 0:D_H],
                    preferred_element_type=jnp.float32)
            + bvec_ref[bb:bb + 1, 0:D_H])
    return o_layers


def _run_layers(q, o_layers, wmat_ref, bvec_ref, ml):
    """Decoder stack for one depth step; returns masked (tb, 128) logits."""
    for l in range(N_LAYER):
        rb = 32 + 128 * l
        bb = 1 + 8 * l
        q = _layernorm(q + o_layers[l],
                       bvec_ref[bb + 1:bb + 2, 0:D_H],
                       bvec_ref[bb + 2:bb + 3, 0:D_H])
        h = jnp.maximum(
            jnp.dot(q, wmat_ref[rb + 32:rb + 64, 0:D_HH],
                    preferred_element_type=jnp.float32)
            + bvec_ref[bb + 3:bb + 4, 0:D_HH], 0.0)
        f = (jnp.dot(h, wmat_ref[rb + 64:rb + 128, 0:D_H],
                     preferred_element_type=jnp.float32)
             + bvec_ref[bb + 4:bb + 5, 0:D_H])
        q = _layernorm(q + f,
                       bvec_ref[bb + 5:bb + 6, 0:D_H],
                       bvec_ref[bb + 6:bb + 7, 0:D_H])
    # classifier (128-lane padded) + additive label-graph mask
    return (jnp.dot(q, wmat_ref[0:D_H, :], preferred_element_type=jnp.float32)
            + bvec_ref[0:1, :] + ml)


# ------------------------------ Pallas kernels --------------------------------
def decoder_ar_kernel(e_ref, tabs_ref, wmat_ref, bvec_ref, out_ref):
    """Autoregressive path: all MAX_DEPTH steps unrolled inside one grid step."""
    tb = e_ref.shape[0]
    e = e_ref[...]
    o_layers = _fold_attn(e, wmat_ref, bvec_ref)

    emb_tab = tabs_ref[0:LANES, 0:D_H]          # (128, 32), rows >= 16 are zero
    msk_tab = tabs_ref[LANES:2 * LANES, :]      # (128, 128) additive mask table
    lane = jax.lax.broadcasted_iota(jnp.int32, (tb, LANES), 1)

    pieces = []
    logits = None
    for s in range(MAX_DEPTH):                  # static unroll (sequential chain)
        if s == 0:
            d_prev = jnp.zeros((tb, 1), jnp.int32)
        else:
            # first-occurrence argmax over 128 lanes; padded lanes hold -1e9
            row_max = jnp.max(logits, axis=-1, keepdims=True)
            d_prev = jnp.min(jnp.where(logits == row_max, lane, LANES),
                             axis=-1, keepdims=True)
        onehot = (lane == d_prev).astype(jnp.float32)          # (tb, 128)
        q = jnp.dot(onehot, emb_tab, preferred_element_type=jnp.float32)
        ml = jnp.dot(onehot, msk_tab, preferred_element_type=jnp.float32)
        logits = _run_layers(q, o_layers, wmat_ref, bvec_ref, ml)
        pieces.append(logits[:, 0:N_LABEL])

    pad = jnp.zeros((tb, LANES - MAX_DEPTH * N_LABEL), jnp.float32)
    out_ref[...] = jnp.concatenate(pieces + [pad], axis=-1)    # one full store


def decoder_tf_kernel(e_ref, d1h_ref, tabs_ref, wmat_ref, bvec_ref, out_ref):
    """Teacher-forcing path: single step, one-hot labels provided, no argmax."""
    e = e_ref[...]
    onehot = d1h_ref[...]                                       # (tb, 128)
    o_layers = _fold_attn(e, wmat_ref, bvec_ref)
    q = jnp.dot(onehot, tabs_ref[0:LANES, 0:D_H],
                preferred_element_type=jnp.float32)
    ml = jnp.dot(onehot, tabs_ref[LANES:2 * LANES, :],
                 preferred_element_type=jnp.float32)
    out_ref[...] = _run_layers(q, o_layers, wmat_ref, bvec_ref, ml)


# ------------------------------ host packing ---------------------------------
def pack_decoder(params, label_graph):
    wt, bt = params["wt"], params["bt"]

    W = jnp.zeros((WMAT_ROWS, LANES), jnp.float32)
    W = W.at[0:D_H, 0:N_LABEL].set(params["wc"])
    Bv = jnp.zeros((BVEC_ROWS, LANES), jnp.float32)
    Bv = Bv.at[0, 0:N_LABEL].set(params["bc"])
    for l in range(N_LAYER):
        rb = 32 + 128 * l
        bb = 1 + 8 * l
        wvo = params["wv"][l] @ params["wo"][l]                  # (D_H, D_H)
        wto = wt @ wvo                                           # (D_MODEL, D_H)
        bto = bt @ wvo + params["bv"][l] @ params["wo"][l] + params["bo"][l]
        W = W.at[rb:rb + D_MODEL, 0:D_H].set(wto)
        W = W.at[rb + 32:rb + 32 + D_H, 0:D_HH].set(params["w1"][l])
        W = W.at[rb + 64:rb + 64 + D_HH, 0:D_H].set(params["w2"][l])
        Bv = Bv.at[bb + 0, 0:D_H].set(bto)
        Bv = Bv.at[bb + 1, 0:D_H].set(params["lng"][l, 0])
        Bv = Bv.at[bb + 2, 0:D_H].set(params["lnb"][l, 0])
        Bv = Bv.at[bb + 3, 0:D_HH].set(params["b1"][l])
        Bv = Bv.at[bb + 4, 0:D_H].set(params["b2"][l])
        Bv = Bv.at[bb + 5, 0:D_H].set(params["lng"][l, 1])
        Bv = Bv.at[bb + 6, 0:D_H].set(params["lnb"][l, 1])

    T = jnp.zeros((TABS_ROWS, LANES), jnp.float32)
    T = T.at[0:N_LABEL, 0:D_H].set(params["label_emb"])
    # additive mask rows: allowed -> 0, forbidden -> -1e9, padded lanes -> -1e9
    add_mask = jnp.full((N_LABEL, LANES), NEG, jnp.float32)
    add_mask = add_mask.at[:, 0:N_LABEL].set(
        jnp.where(label_graph > 0, 0.0, NEG).astype(jnp.float32))
    T = T.at[LANES:LANES + N_LABEL, :].set(add_mask)
    return {"wmat": W, "bvec": Bv, "tabs": T}


# ------------------------------ kernel wrappers --------------------------------
def _round_up(x, m):
    return -(-x // m) * m


def _tile_plan(bp):
    bp8 = _round_up(bp, 8)
    if bp8 <= 8:
        return bp8, bp8
    # at least two batch tiles so both v7x TensorCores get work
    tile_b = _round_up(-(-bp8 // 2), 8)
    if tile_b >= 256:
        tile_b = _round_up(tile_b, 256)      # full MXU M-extent on v6e/v7x
    tile_b = min(tile_b, TILE_B_MAX)
    return tile_b, _round_up(bp8, tile_b)


_COMPILER_PARAMS = pltpu.CompilerParams(
    dimension_semantics=("parallel",),
    vmem_limit_bytes=32 * 1024 * 1024)


def run_decoder_ar(packed, e_cls):
    """Fused autoregressive decoder: returns (bp, MAX_DEPTH*N_LABEL) logits."""
    bp = e_cls.shape[0]
    tile_b, bp_pad = _tile_plan(bp)
    if bp_pad != bp:
        e_cls = jnp.pad(e_cls, ((0, bp_pad - bp), (0, 0)))
    row = lambda i: (i, 0)
    whole = lambda i: (0, 0)
    out = pl.pallas_call(
        decoder_ar_kernel,
        out_shape=jax.ShapeDtypeStruct((bp_pad, LANES), jnp.float32),
        grid=(bp_pad // tile_b,),
        in_specs=[
            pl.BlockSpec((tile_b, D_MODEL), row),
            pl.BlockSpec((TABS_ROWS, LANES), whole),
            pl.BlockSpec((WMAT_ROWS, LANES), whole),
            pl.BlockSpec((BVEC_ROWS, LANES), whole),
        ],
        out_specs=pl.BlockSpec((tile_b, LANES), row),
        compiler_params=_COMPILER_PARAMS,
    )(e_cls, packed["tabs"], packed["wmat"], packed["bvec"])
    return out[:bp, :MAX_DEPTH * N_LABEL]


def run_decoder_tf(packed, e_cls, d_onehot):
    """Teacher-forcing decoder (one step): returns (bp, N_LABEL) logits."""
    bp = e_cls.shape[0]
    tile_b, bp_pad = _tile_plan(bp)
    if bp_pad != bp:
        e_cls = jnp.pad(e_cls, ((0, bp_pad - bp), (0, 0)))
        d_onehot = jnp.pad(d_onehot, ((0, bp_pad - bp), (0, 0)))
    row = lambda i: (i, 0)
    whole = lambda i: (0, 0)
    out = pl.pallas_call(
        decoder_tf_kernel,
        out_shape=jax.ShapeDtypeStruct((bp_pad, LANES), jnp.float32),
        grid=(bp_pad // tile_b,),
        in_specs=[
            pl.BlockSpec((tile_b, D_MODEL), row),
            pl.BlockSpec((tile_b, LANES), row),
            pl.BlockSpec((TABS_ROWS, LANES), whole),
            pl.BlockSpec((WMAT_ROWS, LANES), whole),
            pl.BlockSpec((BVEC_ROWS, LANES), whole),
        ],
        out_specs=pl.BlockSpec((tile_b, LANES), row),
        compiler_params=_COMPILER_PARAMS,
    )(e_cls, d_onehot, packed["tabs"], packed["wmat"], packed["bvec"])
    return out[:bp, :N_LABEL]


# ------------------------------ model forward ---------------------------------
def mini_align_forward(params, packed, input_ids, attn_mask, decoder_input=None):
    # "encoder": deterministic embedding lookup -> last_hidden_state[:, 0, :]
    e = jnp.take(params["enc_emb"], input_ids, axis=0)[:, 0, :]   # (B, D_MODEL)
    # attn_mask[:, 0] is a functional no-op: softmax over a single CLS key == 1.
    del attn_mask

    if decoder_input is not None:
        rep = MAX_DEPTH - 1
        b_e = jnp.tile(e, (rep, 1))                                # (Bp, D_MODEL)
        b_d = decoder_input.reshape(-1)                            # (Bp,)
        d1h = jax.nn.one_hot(b_d, LANES, dtype=jnp.float32)        # lane-dense
        return run_decoder_tf(packed, b_e, d1h)                    # (Bp, N_LABEL)
    else:
        return run_decoder_ar(packed, e)                           # (B, D*N_LABEL)


# --------------------------- pure-JAX reference -------------------------------
def decoder_ref(params, label_graph, e_cls, d_idx):
    t = e_cls @ params["wt"] + params["bt"]
    q = params["label_emb"][d_idx]
    ml = jnp.where(label_graph[d_idx] > 0, 0.0, NEG)
    for l in range(N_LAYER):
        v = t @ params["wv"][l] + params["bv"][l]
        o = v @ params["wo"][l] + params["bo"][l]
        q = _layernorm(q + o, params["lng"][l, 0], params["lnb"][l, 0])
        h = jnp.maximum(q @ params["w1"][l] + params["b1"][l], 0.0)
        f = h @ params["w2"][l] + params["b2"][l]
        q = _layernorm(q + f, params["lng"][l, 1], params["lnb"][l, 1])
    return q @ params["wc"] + params["bc"] + ml


def mini_align_forward_ref(params, label_graph, input_ids, attn_mask,
                           decoder_input=None):
    e = jnp.take(params["enc_emb"], input_ids, axis=0)[:, 0, :]
    if decoder_input is not None:
        rep = MAX_DEPTH - 1
        b_e = jnp.tile(e, (rep, 1))
        b_d = decoder_input.reshape(-1)
        return decoder_ref(params, label_graph, b_e, b_d)
    B = e.shape[0]
    out = None
    preds = []
    for _ in range(MAX_DEPTH):
        d = (jnp.argmax(out, axis=-1).astype(jnp.int32)
             if out is not None else jnp.zeros((B,), jnp.int32))
        out = decoder_ref(params, label_graph, e, d)
        preds.append(out)
    return jnp.concatenate(preds, axis=-1)


# ------------------------------ parameter init --------------------------------
def init_params(key):
    ks = jax.random.split(key, 16)
    nrm = lambda k, s: 0.05 * jax.random.normal(k, s, dtype=jnp.float32)
    return {
        "enc_emb":   nrm(ks[0], (VOCAB, D_MODEL)),
        "label_emb": nrm(ks[1], (N_LABEL, D_H)),
        "wt": nrm(ks[2], (D_MODEL, D_H)),
        "bt": nrm(ks[3], (D_H,)),
        "wv": nrm(ks[4], (N_LAYER, D_H, D_H)),
        "bv": nrm(ks[5], (N_LAYER, D_H)),
        "wo": nrm(ks[6], (N_LAYER, D_H, D_H)),
        "bo": nrm(ks[7], (N_LAYER, D_H)),
        "lng": 1.0 + nrm(ks[8], (N_LAYER, 2, D_H)),
        "lnb": nrm(ks[9], (N_LAYER, 2, D_H)),
        "w1": nrm(ks[10], (N_LAYER, D_H, D_HH)),
        "b1": nrm(ks[11], (N_LAYER, D_HH)),
        "w2": nrm(ks[12], (N_LAYER, D_HH, D_H)),
        "b2": nrm(ks[13], (N_LAYER, D_H)),
        "wc": nrm(ks[14], (D_H, N_LABEL)),
        "bc": nrm(ks[15], (N_LABEL,)),
    }


# ----------------------------------- main --------------------------------------
if __name__ == "__main__":
    key = jax.random.PRNGKey(0)
    kp, ki, kd = jax.random.split(key, 3)
    params = init_params(kp)

    # deterministic binary label graph with self-loops
    r = jnp.arange(N_LABEL)
    label_graph = (((r[:, None] + r[None, :]) % 3) != 0).astype(jnp.float32)
    label_graph = jnp.maximum(label_graph, jnp.eye(N_LABEL, dtype=jnp.float32))

    packed = pack_decoder(params, label_graph)

    B, S = 4, 8
    input_ids = jax.random.randint(ki, (B, S), 0, VOCAB)
    attn_mask = jnp.ones((B, S), jnp.int32)
    decoder_input = jax.random.randint(kd, (MAX_DEPTH - 1, B), 0, N_LABEL)

    # teacher-forcing path: Bp = B*(MAX_DEPTH-1) = 8, single specialized kernel
    pred_tf = mini_align_forward(params, packed, input_ids, attn_mask,
                                 decoder_input)
    jax.block_until_ready(pred_tf)
    ref_tf = mini_align_forward_ref(params, label_graph, input_ids, attn_mask,
                                    decoder_input)
    assert pred_tf.shape == (B * (MAX_DEPTH - 1), N_LABEL)
    assert jnp.allclose(pred_tf, ref_tf, atol=1e-3, rtol=1e-3), \
        float(jnp.max(jnp.abs(pred_tf - ref_tf)))

    # autoregressive path: one fused kernel launch, MAX_DEPTH steps unrolled
    pred_ar = mini_align_forward(params, packed, input_ids, attn_mask, None)
    jax.block_until_ready(pred_ar)
    ref_ar = mini_align_forward_ref(params, label_graph, input_ids, attn_mask,
                                    None)
    assert pred_ar.shape == (B, MAX_DEPTH * N_LABEL)
    assert jnp.allclose(pred_ar, ref_ar, atol=1e-3, rtol=1e-3), \
        float(jnp.max(jnp.abs(pred_ar - ref_ar)))

    print("KERNEL_OK")
</pallas_src>

<mosaic_0001>
module attributes {stable_mosaic.version = 11 : i64} {
  func.func @decoder_tf_kernel(%arg0: i32, %arg1: memref<8x32xf32, #tpu.memory_space<vmem>>, %arg2: memref<8x128xf32, #tpu.memory_space<vmem>>, %arg3: memref<256x128xf32, #tpu.memory_space<vmem>>, %arg4: memref<288x128xf32, #tpu.memory_space<vmem>>, %arg5: memref<24x128xf32, #tpu.memory_space<vmem>>, %arg6: memref<8x128xf32, #tpu.memory_space<vmem>>) attributes {dimension_semantics = [#tpu.dimension_semantics<parallel>], iteration_bounds = array<i64: 1>, scalar_prefetch = 0 : i64, scratch_operands = 0 : i64, tpu.core_type = #tpu.core_type<tc>, window_params = [{transform_indices = @transform_0, window_bounds = array<i64: 8, 32>}, {transform_indices = @transform_1, window_bounds = array<i64: 8, 128>}, {pipeline_mode = #tpu.pipeline_mode<synchronous>, transform_indices = @transform_2, window_bounds = array<i64: 256, 128>}, {pipeline_mode = #tpu.pipeline_mode<synchronous>, transform_indices = @transform_3, window_bounds = array<i64: 288, 128>}, {pipeline_mode = #tpu.pipeline_mode<synchronous>, transform_indices = @transform_4, window_bounds = array<i64: 24, 128>}, {transform_indices = @transform_5, window_bounds = array<i64: 8, 128>}]} {
    %c0 = arith.constant 0 : index
    %c0_0 = arith.constant 0 : index
    %0 = vector.load %arg1[%c0, %c0_0] : memref<8x32xf32, #tpu.memory_space<vmem>>, vector<8x32xf32>
    %c0_1 = arith.constant 0 : index
    %c0_2 = arith.constant 0 : index
    %1 = vector.load %arg2[%c0_1, %c0_2] : memref<8x128xf32, #tpu.memory_space<vmem>>, vector<8x128xf32>
    %c32 = arith.constant 32 : index
    %c0_3 = arith.constant 0 : index
    %2 = vector.load %arg4[%c32, %c0_3] : memref<288x128xf32, #tpu.memory_space<vmem>>, vector<32x32xf32>
    %cst = arith.constant dense<0.000000e+00> : vector<8x32xf32>
    %3 = tpu.matmul %0, %2, %cst {dimension_numbers = #tpu.dot_dimension_numbers<[1], [0], [0], [1], [0, 0, 1, 1], [], []>} : vector<8x32xf32>, vector<32x32xf32>, vector<8x32xf32> -> vector<8x32xf32>
    %c1 = arith.constant 1 : index
    %c0_4 = arith.constant 0 : index
    %4 = vector.load %arg5[%c1, %c0_4] : memref<24x128xf32, #tpu.memory_space<vmem>>, vector<1x32xf32>
    %5 = vector.broadcast %4 : vector<1x32xf32> to vector<8x32xf32>
    %6 = arith.addf %3, %5 : vector<8x32xf32>
    %c160 = arith.constant 160 : index
    %c0_5 = arith.constant 0 : index
    %7 = vector.load %arg4[%c160, %c0_5] : memref<288x128xf32, #tpu.memory_space<vmem>>, vector<32x32xf32>
    %cst_6 = arith.constant dense<0.000000e+00> : vector<8x32xf32>
    %8 = tpu.matmul %0, %7, %cst_6 {dimension_numbers = #tpu.dot_dimension_numbers<[1], [0], [0], [1], [0, 0, 1, 1], [], []>} : vector<8x32xf32>, vector<32x32xf32>, vector<8x32xf32> -> vector<8x32xf32>
    %c9 = arith.constant 9 : index
    %c0_7 = arith.constant 0 : index
    %9 = vector.load %arg5[%c9, %c0_7] : memref<24x128xf32, #tpu.memory_space<vmem>>, vector<1x32xf32>
    %10 = vector.broadcast %9 : vector<1x32xf32> to vector<8x32xf32>
    %11 = arith.addf %8, %10 : vector<8x32xf32>
    %c0_8 = arith.constant 0 : index
    %c0_9 = arith.constant 0 : index
    %12 = vector.load %arg3[%c0_8, %c0_9] : memref<256x128xf32, #tpu.memory_space<vmem>>, vector<128x32xf32>
    %cst_10 = arith.constant dense<0.000000e+00> : vector<8x32xf32>
    %13 = tpu.matmul %1, %12, %cst_10 {dimension_numbers = #tpu.dot_dimension_numbers<[1], [0], [0], [1], [0, 0, 1, 1], [], []>} : vector<8x128xf32>, vector<128x32xf32>, vector<8x32xf32> -> vector<8x32xf32>
    %c128 = arith.constant 128 : index
    %c0_11 = arith.constant 0 : index
    %14 = vector.load %arg3[%c128, %c0_11] : memref<256x128xf32, #tpu.memory_space<vmem>>, vector<128x128xf32>
    %cst_12 = arith.constant dense<0.000000e+00> : vector<8x128xf32>
    %15 = tpu.matmul %1, %14, %cst_12 {dimension_numbers = #tpu.dot_dimension_numbers<[1], [0], [0], [1], [0, 0, 1, 1], [], []>} : vector<8x128xf32>, vector<128x128xf32>, vector<8x128xf32> -> vector<8x128xf32>
    %16 = arith.addf %13, %6 : vector<8x32xf32>
    %c2 = arith.constant 2 : index
    %c0_13 = arith.constant 0 : index
    %17 = vector.load %arg5[%c2, %c0_13] : memref<24x128xf32, #tpu.memory_space<vmem>>, vector<1x32xf32>
    %c3 = arith.constant 3 : index
    %c0_14 = arith.constant 0 : index
    %18 = vector.load %arg5[%c3, %c0_14] : memref<24x128xf32, #tpu.memory_space<vmem>>, vector<1x32xf32>
    %cst_15 = arith.constant dense<0.000000e+00> : vector<8xf32>
    %19 = vector.multi_reduction <add>, %16, %cst_15 [1] : vector<8x32xf32> to vector<8xf32>
    %20 = vector.shape_cast %19 : vector<8xf32> to vector<8x1xf32>
    %cst_16 = arith.constant 3.200000e+01 : f32
    %21 = vector.broadcast %cst_16 : f32 to vector<8x1xf32>
    %22 = arith.divf %20, %21 : vector<8x1xf32>
    %23 = vector.broadcast %22 : vector<8x1xf32> to vector<8x32xf32>
    %24 = arith.subf %16, %23 : vector<8x32xf32>
    %25 = arith.mulf %24, %24 : vector<8x32xf32>
    %cst_17 = arith.constant dense<0.000000e+00> : vector<8xf32>
    %26 = vector.multi_reduction <add>, %25, %cst_17 [1] : vector<8x32xf32> to vector<8xf32>
    %27 = vector.shape_cast %26 : vector<8xf32> to vector<8x1xf32>
    %cst_18 = arith.constant 3.200000e+01 : f32
    %28 = vector.broadcast %cst_18 : f32 to vector<8x1xf32>
    %29 = arith.divf %27, %28 : vector<8x1xf32>
    %30 = vector.broadcast %22 : vector<8x1xf32> to vector<8x32xf32>
    %31 = arith.subf %16, %30 : vector<8x32xf32>
    %cst_19 = arith.constant 9.99999974E-6 : f32
    %32 = vector.broadcast %cst_19 : f32 to vector<8x1xf32>
    %33 = arith.addf %29, %32 : vector<8x1xf32>
    %34 = math.rsqrt %33 : vector<8x1xf32>
    %35 = vector.broadcast %34 : vector<8x1xf32> to vector<8x32xf32>
    %36 = arith.mulf %31, %35 : vector<8x32xf32>
    %37 = vector.broadcast %17 : vector<1x32xf32> to vector<8x32xf32>
    %38 = arith.mulf %36, %37 : vector<8x32xf32>
    %39 = vector.broadcast %18 : vector<1x32xf32> to vector<8x32xf32>
    %40 = arith.addf %38, %39 : vector<8x32xf32>
    %c64 = arith.constant 64 : index
    %c0_20 = arith.constant 0 : index
    %41 = vector.load %arg4[%c64, %c0_20] : memref<288x128xf32, #tpu.memory_space<vmem>>, vector<32x64xf32>
    %cst_21 = arith.constant dense<0.000000e+00> : vector<8x64xf32>
    %42 = tpu.matmul %40, %41, %cst_21 {dimension_numbers = #tpu.dot_dimension_numbers<[1], [0], [0], [1], [0, 0, 1, 1], [], []>} : vector<8x32xf32>, vector<32x64xf32>, vector<8x64xf32> -> vector<8x64xf32>
    %c4 = arith.constant 4 : index
    %c0_22 = arith.constant 0 : index
    %43 = vector.load %arg5[%c4, %c0_22] : memref<24x128xf32, #tpu.memory_space<vmem>>, vector<1x64xf32>
    %44 = vector.broadcast %43 : vector<1x64xf32> to vector<8x64xf32>
    %45 = arith.addf %42, %44 : vector<8x64xf32>
    %cst_23 = arith.constant 0.000000e+00 : f32
    %46 = vector.broadcast %cst_23 : f32 to vector<8x64xf32>
    %47 = arith.maximumf %45, %46 : vector<8x64xf32>
    %c96 = arith.constant 96 : index
    %c0_24 = arith.constant 0 : index
    %48 = vector.load %arg4[%c96, %c0_24] : memref<288x128xf32, #tpu.memory_space<vmem>>, vector<64x32xf32>
    %cst_25 = arith.constant dense<0.000000e+00> : vector<8x32xf32>
    %49 = tpu.matmul %47, %48, %cst_25 {dimension_numbers = #tpu.dot_dimension_numbers<[1], [0], [0], [1], [0, 0, 1, 1], [], []>} : vector<8x64xf32>, vector<64x32xf32>, vector<8x32xf32> -> vector<8x32xf32>
    %c5 = arith.constant 5 : index
    %c0_26 = arith.constant 0 : index
    %50 = vector.load %arg5[%c5, %c0_26] : memref<24x128xf32, #tpu.memory_space<vmem>>, vector<1x32xf32>
    %51 = vector.broadcast %50 : vector<1x32xf32> to vector<8x32xf32>
    %52 = arith.addf %49, %51 : vector<8x32xf32>
    %53 = arith.addf %40, %52 : vector<8x32xf32>
    %c6 = arith.constant 6 : index
    %c0_27 = arith.constant 0 : index
    %54 = vector.load %arg5[%c6, %c0_27] : memref<24x128xf32, #tpu.memory_space<vmem>>, vector<1x32xf32>
    %c7 = arith.constant 7 : index
    %c0_28 = arith.constant 0 : index
    %55 = vector.load %arg5[%c7, %c0_28] : memref<24x128xf32, #tpu.memory_space<vmem>>, vector<1x32xf32>
    %cst_29 = arith.constant dense<0.000000e+00> : vector<8xf32>
    %56 = vector.multi_reduction <add>, %53, %cst_29 [1] : vector<8x32xf32> to vector<8xf32>
    %57 = vector.shape_cast %56 : vector<8xf32> to vector<8x1xf32>
    %cst_30 = arith.constant 3.200000e+01 : f32
    %58 = vector.broadcast %cst_30 : f32 to vector<8x1xf32>
    %59 = arith.divf %57, %58 : vector<8x1xf32>
    %60 = vector.broadcast %59 : vector<8x1xf32> to vector<8x32xf32>
    %61 = arith.subf %53, %60 : vector<8x32xf32>
    %62 = arith.mulf %61, %61 : vector<8x32xf32>
    %cst_31 = arith.constant dense<0.000000e+00> : vector<8xf32>
    %63 = vector.multi_reduction <add>, %62, %cst_31 [1] : vector<8x32xf32> to vector<8xf32>
    %64 = vector.shape_cast %63 : vector<8xf32> to vector<8x1xf32>
    %cst_32 = arith.constant 3.200000e+01 : f32
    %65 = vector.broadcast %cst_32 : f32 to vector<8x1xf32>
    %66 = arith.divf %64, %65 : vector<8x1xf32>
    %67 = vector.broadcast %59 : vector<8x1xf32> to vector<8x32xf32>
    %68 = arith.subf %53, %67 : vector<8x32xf32>
    %cst_33 = arith.constant 9.99999974E-6 : f32
    %69 = vector.broadcast %cst_33 : f32 to vector<8x1xf32>
    %70 = arith.addf %66, %69 : vector<8x1xf32>
    %71 = math.rsqrt %70 : vector<8x1xf32>
    %72 = vector.broadcast %71 : vector<8x1xf32> to vector<8x32xf32>
    %73 = arith.mulf %68, %72 : vector<8x32xf32>
    %74 = vector.broadcast %54 : vector<1x32xf32> to vector<8x32xf32>
    %75 = arith.mulf %73, %74 : vector<8x32xf32>
    %76 = vector.broadcast %55 : vector<1x32xf32> to vector<8x32xf32>
    %77 = arith.addf %75, %76 : vector<8x32xf32>
    %78 = arith.addf %77, %11 : vector<8x32xf32>
    %c10 = arith.constant 10 : index
    %c0_34 = arith.constant 0 : index
    %79 = vector.load %arg5[%c10, %c0_34] : memref<24x128xf32, #tpu.memory_space<vmem>>, vector<1x32xf32>
    %c11 = arith.constant 11 : index
    %c0_35 = arith.constant 0 : index
    %80 = vector.load %arg5[%c11, %c0_35] : memref<24x128xf32, #tpu.memory_space<vmem>>, vector<1x32xf32>
    %cst_36 = arith.constant dense<0.000000e+00> : vector<8xf32>
    %81 = vector.multi_reduction <add>, %78, %cst_36 [1] : vector<8x32xf32> to vector<8xf32>
    %82 = vector.shape_cast %81 : vector<8xf32> to vector<8x1xf32>
    %cst_37 = arith.constant 3.200000e+01 : f32
    %83 = vector.broadcast %cst_37 : f32 to vector<8x1xf32>
    %84 = arith.divf %82, %83 : vector<8x1xf32>
    %85 = vector.broadcast %84 : vector<8x1xf32> to vector<8x32xf32>
    %86 = arith.subf %78, %85 : vector<8x32xf32>
    %87 = arith.mulf %86, %86 : vector<8x32xf32>
    %cst_38 = arith.constant dense<0.000000e+00> : vector<8xf32>
    %88 = vector.multi_reduction <add>, %87, %cst_38 [1] : vector<8x32xf32> to vector<8xf32>
    %89 = vector.shape_cast %88 : vector<8xf32> to vector<8x1xf32>
    %cst_39 = arith.constant 3.200000e+01 : f32
    %90 = vector.broadcast %cst_39 : f32 to vector<8x1xf32>
    %91 = arith.divf %89, %90 : vector<8x1xf32>
    %92 = vector.broadcast %84 : vector<8x1xf32> to vector<8x32xf32>
    %93 = arith.subf %78, %92 : vector<8x32xf32>
    %cst_40 = arith.constant 9.99999974E-6 : f32
    %94 = vector.broadcast %cst_40 : f32 to vector<8x1xf32>
    %95 = arith.addf %91, %94 : vector<8x1xf32>
    %96 = math.rsqrt %95 : vector<8x1xf32>
    %97 = vector.broadcast %96 : vector<8x1xf32> to vector<8x32xf32>
    %98 = arith.mulf %93, %97 : vector<8x32xf32>
    %99 = vector.broadcast %79 : vector<1x32xf32> to vector<8x32xf32>
    %100 = arith.mulf %98, %99 : vector<8x32xf32>
    %101 = vector.broadcast %80 : vector<1x32xf32> to vector<8x32xf32>
    %102 = arith.addf %100, %101 : vector<8x32xf32>
    %c192 = arith.constant 192 : index
    %c0_41 = arith.constant 0 : index
    %103 = vector.load %arg4[%c192, %c0_41] : memref<288x128xf32, #tpu.memory_space<vmem>>, vector<32x64xf32>
    %cst_42 = arith.constant dense<0.000000e+00> : vector<8x64xf32>
    %104 = tpu.matmul %102, %103, %cst_42 {dimension_numbers = #tpu.dot_dimension_numbers<[1], [0], [0], [1], [0, 0, 1, 1], [], []>} : vector<8x32xf32>, vector<32x64xf32>, vector<8x64xf32> -> vector<8x64xf32>
    %c12 = arith.constant 12 : index
    %c0_43 = arith.constant 0 : index
    %105 = vector.load %arg5[%c12, %c0_43] : memref<24x128xf32, #tpu.memory_space<vmem>>, vector<1x64xf32>
    %106 = vector.broadcast %105 : vector<1x64xf32> to vector<8x64xf32>
    %107 = arith.addf %104, %106 : vector<8x64xf32>
    %cst_44 = arith.constant 0.000000e+00 : f32
    %108 = vector.broadcast %cst_44 : f32 to vector<8x64xf32>
    %109 = arith.maximumf %107, %108 : vector<8x64xf32>
    %c224 = arith.constant 224 : index
    %c0_45 = arith.constant 0 : index
    %110 = vector.load %arg4[%c224, %c0_45] : memref<288x128xf32, #tpu.memory_space<vmem>>, vector<64x32xf32>
    %cst_46 = arith.constant dense<0.000000e+00> : vector<8x32xf32>
    %111 = tpu.matmul %109, %110, %cst_46 {dimension_numbers = #tpu.dot_dimension_numbers<[1], [0], [0], [1], [0, 0, 1, 1], [], []>} : vector<8x64xf32>, vector<64x32xf32>, vector<8x32xf32> -> vector<8x32xf32>
    %c13 = arith.constant 13 : index
    %c0_47 = arith.constant 0 : index
    %112 = vector.load %arg5[%c13, %c0_47] : memref<24x128xf32, #tpu.memory_space<vmem>>, vector<1x32xf32>
    %113 = vector.broadcast %112 : vector<1x32xf32> to vector<8x32xf32>
    %114 = arith.addf %111, %113 : vector<8x32xf32>
    %115 = arith.addf %102, %114 : vector<8x32xf32>
    %c14 = arith.constant 14 : index
    %c0_48 = arith.constant 0 : index
    %116 = vector.load %arg5[%c14, %c0_48] : memref<24x128xf32, #tpu.memory_space<vmem>>, vector<1x32xf32>
    %c15 = arith.constant 15 : index
    %c0_49 = arith.constant 0 : index
    %117 = vector.load %arg5[%c15, %c0_49] : memref<24x128xf32, #tpu.memory_space<vmem>>, vector<1x32xf32>
    %cst_50 = arith.constant dense<0.000000e+00> : vector<8xf32>
    %118 = vector.multi_reduction <add>, %115, %cst_50 [1] : vector<8x32xf32> to vector<8xf32>
    %119 = vector.shape_cast %118 : vector<8xf32> to vector<8x1xf32>
    %cst_51 = arith.constant 3.200000e+01 : f32
    %120 = vector.broadcast %cst_51 : f32 to vector<8x1xf32>
    %121 = arith.divf %119, %120 : vector<8x1xf32>
    %122 = vector.broadcast %121 : vector<8x1xf32> to vector<8x32xf32>
    %123 = arith.subf %115, %122 : vector<8x32xf32>
    %124 = arith.mulf %123, %123 : vector<8x32xf32>
    %cst_52 = arith.constant dense<0.000000e+00> : vector<8xf32>
    %125 = vector.multi_reduction <add>, %124, %cst_52 [1] : vector<8x32xf32> to vector<8xf32>
    %126 = vector.shape_cast %125 : vector<8xf32> to vector<8x1xf32>
    %cst_53 = arith.constant 3.200000e+01 : f32
    %127 = vector.broadcast %cst_53 : f32 to vector<8x1xf32>
    %128 = arith.divf %126, %127 : vector<8x1xf32>
    %129 = vector.broadcast %121 : vector<8x1xf32> to vector<8x32xf32>
    %130 = arith.subf %115, %129 : vector<8x32xf32>
    %cst_54 = arith.constant 9.99999974E-6 : f32
    %131 = vector.broadcast %cst_54 : f32 to vector<8x1xf32>
    %132 = arith.addf %128, %131 : vector<8x1xf32>
    %133 = math.rsqrt %132 : vector<8x1xf32>
    %134 = vector.broadcast %133 : vector<8x1xf32> to vector<8x32xf32>
    %135 = arith.mulf %130, %134 : vector<8x32xf32>
    %136 = vector.broadcast %116 : vector<1x32xf32> to vector<8x32xf32>
    %137 = arith.mulf %135, %136 : vector<8x32xf32>
    %138 = vector.broadcast %117 : vector<1x32xf32> to vector<8x32xf32>
    %139 = arith.addf %137, %138 : vector<8x32xf32>
    %c0_55 = arith.constant 0 : index
    %c0_56 = arith.constant 0 : index
    %140 = vector.load %arg4[%c0_55, %c0_56] : memref<288x128xf32, #tpu.memory_space<vmem>>, vector<32x128xf32>
    %cst_57 = arith.constant dense<0.000000e+00> : vector<8x128xf32>
    %141 = tpu.matmul %139, %140, %cst_57 {dimension_numbers = #tpu.dot_dimension_numbers<[1], [0], [0], [1], [0, 0, 1, 1], [], []>} : vector<8x32xf32>, vector<32x128xf32>, vector<8x128xf32> -> vector<8x128xf32>
    %c0_58 = arith.constant 0 : index
    %c0_59 = arith.constant 0 : index
    %142 = vector.load %arg5[%c0_58, %c0_59] : memref<24x128xf32, #tpu.memory_space<vmem>>, vector<1x128xf32>
    %143 = vector.broadcast %142 : vector<1x128xf32> to vector<8x128xf32>
    %144 = arith.addf %141, %143 : vector<8x128xf32>
    %145 = arith.addf %144, %15 : vector<8x128xf32>
    %c0_60 = arith.constant 0 : index
    %c0_61 = arith.constant 0 : index
    %146 = vector.load %arg6[%c0_60, %c0_61] : memref<8x128xf32, #tpu.memory_space<vmem>>, vector<8x128xf32>
    tpu.vector_store %arg6[%c0_60, %c0_61], %145 {strides = array<i32>} : memref<8x128xf32, #tpu.memory_space<vmem>>, vector<8x128xf32>,
    return
  }
  func.func @transform_0(%arg0: i32) -> (i32, i32) {
    %c0_i32 = arith.constant 0 : i32
    %c0_i32_0 = arith.constant 0 : i32
    return %arg0, %c0_i32 : i32, i32
  }
  func.func @transform_1(%arg0: i32) -> (i32, i32) {
    %c0_i32 = arith.constant 0 : i32
    %c0_i32_0 = arith.constant 0 : i32
    return %arg0, %c0_i32 : i32, i32
  }
  func.func @transform_2(%arg0: i32) -> (i32, i32) {
    %c0_i32 = arith.constant 0 : i32
    %c0_i32_0 = arith.constant 0 : i32
    %c0_i32_1 = arith.constant 0 : i32
    return %c0_i32, %c0_i32_0 : i32, i32
  }
  func.func @transform_3(%arg0: i32) -> (i32, i32) {
    %c0_i32 = arith.constant 0 : i32
    %c0_i32_0 = arith.constant 0 : i32
    %c0_i32_1 = arith.constant 0 : i32
    return %c0_i32, %c0_i32_0 : i32, i32
  }
  func.func @transform_4(%arg0: i32) -> (i32, i32) {
    %c0_i32 = arith.constant 0 : i32
    %c0_i32_0 = arith.constant 0 : i32
    %c0_i32_1 = arith.constant 0 : i32
    return %c0_i32, %c0_i32_0 : i32, i32
  }
  func.func @transform_5(%arg0: i32) -> (i32, i32) {
    %c0_i32 = arith.constant 0 : i32
    %c0_i32_0 = arith.constant 0 : i32
    return %arg0, %c0_i32 : i32, i32
  }
}

</mosaic_0001>

<llo_original>
// kernel: tpu_custom_call.1
$region0: #{tpu_custom_call.1}
  #allocation0 [shape = 'u32[]', space=smem, size = 0x4, offset = 0x4, fixed_abs, tag = 'smem constant byte address 0x4 - core index']
  #allocation1 [shape = 'u32[144,128]{1,0:T(1,128)}', space=vmem, size = 0x12000, scoped, tag = 'internal scratch']
  %s0 = inlined_call_operand.hbm [shape: f32[8,32], index: 0, kind: input, shape index: {}]
  %s1 = inlined_call_operand.hbm [shape: f32[8,128], index: 1, kind: input, shape index: {}]
  %s2 = inlined_call_operand.hbm [shape: f32[256,128], index: 2, kind: input, shape index: {}]
  %s3 = inlined_call_operand.hbm [shape: f32[288,128], index: 3, kind: input, shape index: {}]
  %s4 = inlined_call_operand.hbm [shape: f32[24,128], index: 4, kind: input, shape index: {}]
  %s5 = inlined_call_operand.hbm [shape: f32[8,128], index: 5, kind: output, shape index: {}]
  %s6 = sld [smem:[#allocation0]]
  $region50: #{tpu_custom_call.1} parent=0
    _
  %s8 = ssub.s32 1, %s6
  %s9 = scalar_select 0, %s8, %s6
  $region1: #{tpu_custom_call.1} parent=0
    #allocation2 [shape = 'u8[4096]{0}', space=vmem, size = 0x1000, scoped, tag = 'input window, operand 0, single buffered']
    #allocation3 [shape = 's32[1]{0}', space=sflag, size = 0x4, scoped, tag = 'scoped memory for tpu_custom_call.1']
    #allocation4 [shape = 's32[1]{0}', space=sflag, size = 0x4, scoped, tag = 'scoped memory for tpu_custom_call.1']
    #allocation5 [shape = 'u8[4096]{0}', space=vmem, size = 0x1000, scoped, tag = 'input window, operand 1, single buffered']
    #allocation6 [shape = 's32[1]{0}', space=sflag, size = 0x4, scoped, tag = 'scoped memory for tpu_custom_call.1']
    #allocation7 [shape = 'u8[131072]{0}', space=vmem, size = 0x20000, scoped, tag = 'input window, operand 2, single buffered']
    #allocation8 [shape = 'u8[147456]{0}', space=vmem, size = 0x24000, scoped, tag = 'input window, operand 3, single buffered']
    #allocation9 [shape = 's32[1]{0}', space=sflag, size = 0x4, scoped, tag = 'scoped memory for tpu_custom_call.1']
    #allocation10 [shape = 'u8[12288]{0}', space=vmem, size = 0x3000, scoped, tag = 'input window, operand 4, single buffered']
    #allocation11 [shape = 'u8[4096]{0}', space=vmem, size = 0x1000, scoped, tag = 'output window, operand 0, single buffered']
    %10 = vsyncpa [#allocation3], 0
    %11 = vsyncpa [#allocation6], 0
    %12 = vsyncpa [#allocation9], 0
    %13 = vsyncpa [#allocation4], 0
    // Predicated region
    $region2: #{tpu_custom_call.1} parent=1 // pred_check
      _
    $region3: #{tpu_custom_call.1} parent=1 // pred_check_branch
      %15 = sbr.rel (0) target = $region5
    $region4: #{tpu_custom_call.1} parent=1 // pred_region
      %s17 = ssub.s32 128, 128
      %18 = vsyncadd [#allocation3], %s17
      %s20 = sshll.u32 [#allocation2], 4
      %s21 = int_to_ptr.vmem [resolvable:$true] %s20
      %23 = dma.hbm_to_vmem [thread:$0]  %s0, 128, %s21, [#allocation3]
    $region5: #{tpu_custom_call.1} parent=1 // pred_fallthru
      _
    // Predicated region
    $region6: #{tpu_custom_call.1} parent=1 // pred_check
      _
    $region7: #{tpu_custom_call.1} parent=1 // pred_check_branch
      %25 = sbr.rel (0) target = $region9
    $region8: #{tpu_custom_call.1} parent=1 // pred_region
      %s27 = ssub.s32 128, 128
      %28 = vsyncadd [#allocation6], %s27
      %s30 = sshll.u32 [#allocation5], 4
      %s31 = int_to_ptr.vmem [resolvable:$true] %s30
      %33 = dma.hbm_to_vmem [thread:$0]  %s1, 128, %s31, [#allocation6]
    $region9: #{tpu_custom_call.1} parent=1 // pred_fallthru
      _
    // Predicated region
    $region10: #{tpu_custom_call.1} parent=1 // pred_check
      _
    $region11: #{tpu_custom_call.1} parent=1 // pred_check_branch
      %35 = sbr.rel (0) target = $region13
    $region12: #{tpu_custom_call.1} parent=1 // pred_region
      %s37 = ssub.s32 4096, 4096
      %38 = vsyncadd [#allocation6], %s37
      %s39 = sshll.u32 [#allocation7], 4
      %s40 = int_to_ptr.vmem [resolvable:$true] %s39
      %45 = dma.hbm_to_vmem [thread:$0]  %s2, 4096, %s40, [#allocation6], 128, 128, 8
    $region13: #{tpu_custom_call.1} parent=1 // pred_fallthru
      _
    // Predicated region
    $region14: #{tpu_custom_call.1} parent=1 // pred_check
      _
    $region15: #{tpu_custom_call.1} parent=1 // pred_check_branch
      %47 = sbr.rel (0) target = $region17
    $region16: #{tpu_custom_call.1} parent=1 // pred_region
      %s49 = ssub.s32 4608, 4608
      %50 = vsyncadd [#allocation9], %s49
      %s51 = sshll.u32 [#allocation8], 4
      %s52 = int_to_ptr.vmem [resolvable:$true] %s51
      %57 = dma.hbm_to_vmem [thread:$0]  %s3, 4608, %s52, [#allocation9], 128, 128, 8
    $region17: #{tpu_custom_call.1} parent=1 // pred_fallthru
      _
    // Predicated region
    $region18: #{tpu_custom_call.1} parent=1 // pred_check
      _
    $region19: #{tpu_custom_call.1} parent=1 // pred_check_branch
      %59 = sbr.rel (0) target = $region21
    $region20: #{tpu_custom_call.1} parent=1 // pred_region
      %s61 = ssub.s32 384, 384
      %62 = vsyncadd [#allocation9], %s61
      %s63 = sshll.u32 [#allocation10], 4
      %s64 = int_to_ptr.vmem [resolvable:$true] %s63
      %69 = dma.hbm_to_vmem [thread:$0]  %s4, 384, %s64, [#allocation9], 128, 128, 8
    $region21: #{tpu_custom_call.1} parent=1 // pred_fallthru
      _
    // Predicated region
    $region22: #{tpu_custom_call.1} parent=1 // pred_check
      _
    $region23: #{tpu_custom_call.1} parent=1 // pred_check_branch
      %71 = sbr.rel (0) target = $region25
    $region24: #{tpu_custom_call.1} parent=1 // pred_region
      %72 = dma.done [#allocation3], 128
    $region25: #{tpu_custom_call.1} parent=1 // pred_fallthru
      _
    // Predicated region
    $region26: #{tpu_custom_call.1} parent=1 // pred_check
      _
    $region27: #{tpu_custom_call.1} parent=1 // pred_check_branch
      %74 = sbr.rel (0) target = $region29
    $region28: #{tpu_custom_call.1} parent=1 // pred_region
      %75 = dma.done [#allocation6], 128
    $region29: #{tpu_custom_call.1} parent=1 // pred_fallthru
      _
    // Predicated region
    $region30: #{tpu_custom_call.1} parent=1 // pred_check
      _
    $region31: #{tpu_custom_call.1} parent=1 // pred_check_branch
      %77 = sbr.rel (0) target = $region33
    $region32: #{tpu_custom_call.1} parent=1 // pred_region
      %78 = dma.done [#allocation6], 4096
    $region33: #{tpu_custom_call.1} parent=1 // pred_fallthru
      _
    // Predicated region
    $region34: #{tpu_custom_call.1} parent=1 // pred_check
      _
    $region35: #{tpu_custom_call.1} parent=1 // pred_check_branch
      %80 = sbr.rel (0) target = $region37
    $region36: #{tpu_custom_call.1} parent=1 // pred_region
      %81 = dma.done [#allocation9], 4608
    $region37: #{tpu_custom_call.1} parent=1 // pred_fallthru
      _
    // Predicated region
    $region38: #{tpu_custom_call.1} parent=1 // pred_check
      _
    $region39: #{tpu_custom_call.1} parent=1 // pred_check_branch
      %83 = sbr.rel (0) target = $region41
    $region40: #{tpu_custom_call.1} parent=1 // pred_region
      %84 = dma.done [#allocation9], 384
    $region41: #{tpu_custom_call.1} parent=1 // pred_fallthru
      _
    %v85 = vld [vmem:[#allocation2] sm:$0xff]
    %v86 = vld [vmem:[#allocation5] sm:$0xff]
    %v87 = vld [vmem:[#allocation8 + $0x20] sm:$0xff]
    %v88 = vld [vmem:[#allocation8 + $0x28] sm:$0xff]
    %v89 = vld [vmem:[#allocation8 + $0x30] sm:$0xff]
    %v90 = vld [vmem:[#allocation8 + $0x38] sm:$0xff]
    %v91 = vld [vmem:[#allocation10 + $0x1] sm:$0x1]
    %v92 = vlaneseq
    %v93 = vshrl.u32 %v92, 7
    %v94 = vsub.s32 0, %v93
    %v95 = vrot.slane %v91, %v94
    %vm96 = vcmask 261120
    %v98 = vsel %vm96, %v85, 0
    %100 = vmatprep.subr.mxu0 0.0
    %101 = vmatpush1.msra.mxu0 0.0
    %102 = vmatprep.subr.mxu0 0.0
    %103 = vmatpush1.msra.mxu0 0.0
    %104 = vmatprep.subr.mxu0 0.0
    %105 = vmatpush1.msra.mxu0 0.0
    %106 = vmatprep.subr.mxu0 0.0
    %107 = vmatpush1.msra.mxu0 0.0
    %108 = vmatprep.subr.mxu0 0.0
    %109 = vmatpush1.msra.mxu0 0.0
    %110 = vmatprep.subr.mxu0 0.0
    %111 = vmatpush1.msra.mxu0 0.0
    %112 = vmatprep.subr.mxu0 0.0
    %113 = vmatpush1.msra.mxu0 0.0
    %114 = vmatprep.subr.mxu0 0.0
    %115 = vmatpush1.msra.mxu0 0.0
    %116 = vmatprep.subr.mxu0 0.0
    %117 = vmatpush1.msra.mxu0 0.0
    %118 = vmatprep.subr.mxu0 0.0
    %119 = vmatpush1.msra.mxu0 0.0
    %120 = vmatprep.subr.mxu0 0.0
    %121 = vmatpush1.msra.mxu0 0.0
    %122 = vmatprep.subr.mxu0 0.0
    %123 = vmatpush1.msra.mxu0 0.0
    %124 = vmatprep.subr.mxu0 0.0
    %125 = vmatpush1.msra.mxu0 %v90
    %126 = vmatprep.subr.mxu0 0.0
    %127 = vmatpush1.msra.mxu0 %v89
    %128 = vmatprep.subr.mxu0 0.0
    %129 = vmatpush1.msra.mxu0 %v88
    %130 = vmatprep.subr.mxu0 0.0
    %131 = vmatpush1.msra.mxu0 %v87
    %132 = vmatprep.subr.mxu0 0.0
    %133 = vmatpush2.msra.mxu0 0.0
    %134 = vmatprep.subr.mxu0 0.0
    %135 = vmatpush2.msra.mxu0 0.0
    %136 = vmatprep.subr.mxu0 0.0
    %137 = vmatpush2.msra.mxu0 0.0
    %138 = vmatprep.subr.mxu0 0.0
    %139 = vmatpush2.msra.mxu0 0.0
    %140 = vmatprep.subr.mxu0 0.0
    %141 = vmatpush2.msra.mxu0 0.0
    %142 = vmatprep.subr.mxu0 0.0
    %143 = vmatpush2.msra.mxu0 0.0
    %144 = vmatprep.subr.mxu0 0.0
    %145 = vmatpush2.msra.mxu0 0.0
    %146 = vmatprep.subr.mxu0 0.0
    %147 = vmatpush2.msra.mxu0 0.0
    %148 = vmatprep.subr.mxu0 0.0
    %149 = vmatpush2.msra.mxu0 0.0
    %150 = vmatprep.subr.mxu0 0.0
    %151 = vmatpush2.msra.mxu0 0.0
    %152 = vmatprep.subr.mxu0 0.0
    %153 = vmatpush2.msra.mxu0 0.0
    %154 = vmatprep.subr.mxu0 0.0
    %155 = vmatpush2.msra.mxu0 0.0
    %156 = vmatprep.subr.mxu0 0.0
    %157 = vmatpush2.msra.mxu0 0.0
    %158 = vmatprep.subr.mxu0 0.0
    %159 = vmatpush2.msra.mxu0 0.0
    %160 = vmatprep.subr.mxu0 0.0
    %161 = vmatpush2.msra.mxu0 0.0
    %162 = vmatprep.subr.mxu0 0.0
    %163 = vmatpush2.msra.mxu0 0.0
    %164 = vmatprep.mubr.f32.mxu0 0.0
    %165 = vmatmul.mubr.f32.gmra.mxu0 %v98
    %v166 = vpop.f32.mrf.mxu0
    %v167 = vadd.f32 %v95, %v166
    %v168 = vpop.f32.mrf.mxu0
    %169 = vdwg.mxu0
    %v170 = vld [vmem:[#allocation8 + $0xa0] sm:$0xff]
    %v171 = vld [vmem:[#allocation8 + $0xa8] sm:$0xff]
    %v172 = vld [vmem:[#allocation8 + $0xb0] sm:$0xff]
    %v173 = vld [vmem:[#allocation8 + $0xb8] sm:$0xff]
    %v174 = vld [vmem:[#allocation10 + $0x9] sm:$0x1]
    %v175 = vlaneseq
    %v176 = vshrl.u32 %v175, 7
    %v177 = vsub.s32 0, %v176
    %v178 = vrot.slane %v174, %v177
    %179 = vmatprep.subr.mxu0 0.0
    %180 = vmatpush1.msra.mxu0 0.0
    %181 = vmatprep.subr.mxu0 0.0
    %182 = vmatpush1.msra.mxu0 0.0
    %183 = vmatprep.subr.mxu0 0.0
    %184 = vmatpush1.msra.mxu0 0.0
    %185 = vmatprep.subr.mxu0 0.0
    %186 = vmatpush1.msra.mxu0 0.0
    %187 = vmatprep.subr.mxu0 0.0
    %188 = vmatpush1.msra.mxu0 0.0
    %189 = vmatprep.subr.mxu0 0.0
    %190 = vmatpush1.msra.mxu0 0.0
    %191 = vmatprep.subr.mxu0 0.0
    %192 = vmatpush1.msra.mxu0 0.0
    %193 = vmatprep.subr.mxu0 0.0
    %194 = vmatpush1.msra.mxu0 0.0
    %195 = vmatprep.subr.mxu0 0.0
    %196 = vmatpush1.msra.mxu0 0.0
    %197 = vmatprep.subr.mxu0 0.0
    %198 = vmatpush1.msra.mxu0 0.0
    %199 = vmatprep.subr.mxu0 0.0
    %200 = vmatpush1.msra.mxu0 0.0
    %201 = vmatprep.subr.mxu0 0.0
    %202 = vmatpush1.msra.mxu0 0.0
    %203 = vmatprep.subr.mxu0 0.0
    %204 = vmatpush1.msra.mxu0 %v173
    %205 = vmatprep.subr.mxu0 0.0
    %206 = vmatpush1.msra.mxu0 %v172
    %207 = vmatprep.subr.mxu0 0.0
    %208 = vmatpush1.msra.mxu0 %v171
    %209 = vmatprep.subr.mxu0 0.0
    %210 = vmatpush1.msra.mxu0 %v170
    %211 = vmatprep.subr.mxu0 0.0
    %212 = vmatpush2.msra.mxu0 0.0
    %213 = vmatprep.subr.mxu0 0.0
    %214 = vmatpush2.msra.mxu0 0.0
    %215 = vmatprep.subr.mxu0 0.0
    %216 = vmatpush2.msra.mxu0 0.0
    %217 = vmatprep.subr.mxu0 0.0
    %218 = vmatpush2.msra.mxu0 0.0
    %219 = vmatprep.subr.mxu0 0.0
    %220 = vmatpush2.msra.mxu0 0.0
    %221 = vmatprep.subr.mxu0 0.0
    %222 = vmatpush2.msra.mxu0 0.0
    %223 = vmatprep.subr.mxu0 0.0
    %224 = vmatpush2.msra.mxu0 0.0
    %225 = vmatprep.subr.mxu0 0.0
    %226 = vmatpush2.msra.mxu0 0.0
    %227 = vmatprep.subr.mxu0 0.0
    %228 = vmatpush2.msra.mxu0 0.0
    %229 = vmatprep.subr.mxu0 0.0
    %230 = vmatpush2.msra.mxu0 0.0
    %231 = vmatprep.subr.mxu0 0.0
    %232 = vmatpush2.msra.mxu0 0.0
    %233 = vmatprep.subr.mxu0 0.0
    %234 = vmatpush2.msra.mxu0 0.0
    %235 = vmatprep.subr.mxu0 0.0
    %236 = vmatpush2.msra.mxu0 0.0
    %237 = vmatprep.subr.mxu0 0.0
    %238 = vmatpush2.msra.mxu0 0.0
    %239 = vmatprep.subr.mxu0 0.0
    %240 = vmatpush2.msra.mxu0 0.0
    %241 = vmatprep.subr.mxu0 0.0
    %242 = vmatpush2.msra.mxu0 0.0
    %243 = vmatprep.mubr.f32.mxu0 0.0
    %244 = vmatmul.mubr.f32.gmra.mxu0 %v98
    %v245 = vpop.f32.mrf.mxu0
    %v246 = vadd.f32 %v178, %v245
    %v247 = vpop.f32.mrf.mxu0
    %248 = vdwg.mxu0
    %v249 = vld [vmem:[#allocation7] sm:$0xff]
    %v250 = vld [vmem:[#allocation7 + $0x8] sm:$0xff]
    %v251 = vld [vmem:[#allocation7 + $0x10] sm:$0xff]
    %v252 = vld [vmem:[#allocation7 + $0x18] sm:$0xff]
    %v253 = vld [vmem:[#allocation7 + $0x20] sm:$0xff]
    %v254 = vld [vmem:[#allocation7 + $0x28] sm:$0xff]
    %v255 = vld [vmem:[#allocation7 + $0x30] sm:$0xff]
    %v256 = vld [vmem:[#allocation7 + $0x38] sm:$0xff]
    %v257 = vld [vmem:[#allocation7 + $0x40] sm:$0xff]
    %v258 = vld [vmem:[#allocation7 + $0x48] sm:$0xff]
    %v259 = vld [vmem:[#allocation7 + $0x50] sm:$0xff]
    %v260 = vld [vmem:[#allocation7 + $0x58] sm:$0xff]
    %v261 = vld [vmem:[#allocation7 + $0x60] sm:$0xff]
    %v262 = vld [vmem:[#allocation7 + $0x68] sm:$0xff]
    %v263 = vld [vmem:[#allocation7 + $0x70] sm:$0xff]
    %v264 = vld [vmem:[#allocation7 + $0x78] sm:$0xff]
    %v265 = vld [vmem:[#allocation7 + $0x80] sm:$0xff]
    %v266 = vld [vmem:[#allocation7 + $0x88] sm:$0xff]
    %v267 = vld [vmem:[#allocation7 + $0x90] sm:$0xff]
    %v268 = vld [vmem:[#allocation7 + $0x98] sm:$0xff]
    %v269 = vld [vmem:[#allocation7 + $0xa0] sm:$0xff]
    %v270 = vld [vmem:[#allocation7 + $0xa8] sm:$0xff]
    %v271 = vld [vmem:[#allocation7 + $0xb0] sm:$0xff]
    %v272 = vld [vmem:[#allocation7 + $0xb8] sm:$0xff]
    %v273 = vld [vmem:[#allocation7 + $0xc0] sm:$0xff]
    %v274 = vld [vmem:[#allocation7 + $0xc8] sm:$0xff]
    %v275 = vld [vmem:[#allocation7 + $0xd0] sm:$0xff]
    %v276 = vld [vmem:[#allocation7 + $0xd8] sm:$0xff]
    %v277 = vld [vmem:[#allocation7 + $0xe0] sm:$0xff]
    %v278 = vld [vmem:[#allocation7 + $0xe8] sm:$0xff]
    %v279 = vld [vmem:[#allocation7 + $0xf0] sm:$0xff]
    %v280 = vld [vmem:[#allocation7 + $0xf8] sm:$0xff]
    %281 = vmatprep.subr.mxu0 0.0
    %282 = vmatpush1.msra.mxu0 %v280
    %283 = vmatprep.subr.mxu0 0.0
    %284 = vmatpush1.msra.mxu0 %v279
    %285 = vmatprep.subr.mxu0 0.0
    %286 = vmatpush1.msra.mxu0 %v278
    %287 = vmatprep.subr.mxu0 0.0
    %288 = vmatpush1.msra.mxu0 %v277
    %289 = vmatprep.subr.mxu0 0.0
    %290 = vmatpush1.msra.mxu0 %v276
    %291 = vmatprep.subr.mxu0 0.0
    %292 = vmatpush1.msra.mxu0 %v275
    %293 = vmatprep.subr.mxu0 0.0
    %294 = vmatpush1.msra.mxu0 %v274
    %295 = vmatprep.subr.mxu0 0.0
    %296 = vmatpush1.msra.mxu0 %v273
    %297 = vmatprep.subr.mxu0 0.0
    %298 = vmatpush1.msra.mxu0 %v272
    %299 = vmatprep.subr.mxu0 0.0
    %300 = vmatpush1.msra.mxu0 %v271
    %301 = vmatprep.subr.mxu0 0.0
    %302 = vmatpush1.msra.mxu0 %v270
    %303 = vmatprep.subr.mxu0 0.0
    %304 = vmatpush1.msra.mxu0 %v269
    %305 = vmatprep.subr.mxu0 0.0
    %306 = vmatpush1.msra.mxu0 %v268
    %307 = vmatprep.subr.mxu0 0.0
    %308 = vmatpush1.msra.mxu0 %v267
    %309 = vmatprep.subr.mxu0 0.0
    %310 = vmatpush1.msra.mxu0 %v266
    %311 = vmatprep.subr.mxu0 0.0
    %312 = vmatpush1.msra.mxu0 %v265
    %313 = vmatprep.subr.mxu0 0.0
    %314 = vmatpush2.msra.mxu0 0.0
    %315 = vmatprep.subr.mxu0 0.0
    %316 = vmatpush2.msra.mxu0 0.0
    %317 = vmatprep.subr.mxu0 0.0
    %318 = vmatpush2.msra.mxu0 0.0
    %319 = vmatprep.subr.mxu0 0.0
    %320 = vmatpush2.msra.mxu0 0.0
    %321 = vmatprep.subr.mxu0 0.0
    %322 = vmatpush2.msra.mxu0 0.0
    %323 = vmatprep.subr.mxu0 0.0
    %324 = vmatpush2.msra.mxu0 0.0
    %325 = vmatprep.subr.mxu0 0.0
    %326 = vmatpush2.msra.mxu0 0.0
    %327 = vmatprep.subr.mxu0 0.0
    %328 = vmatpush2.msra.mxu0 0.0
    %329 = vmatprep.subr.mxu0 0.0
    %330 = vmatpush2.msra.mxu0 0.0
    %331 = vmatprep.subr.mxu0 0.0
    %332 = vmatpush2.msra.mxu0 0.0
    %333 = vmatprep.subr.mxu0 0.0
    %334 = vmatpush2.msra.mxu0 0.0
    %335 = vmatprep.subr.mxu0 0.0
    %336 = vmatpush2.msra.mxu0 0.0
    %337 = vmatprep.subr.mxu0 0.0
    %338 = vmatpush2.msra.mxu0 0.0
    %339 = vmatprep.subr.mxu0 0.0
    %340 = vmatpush2.msra.mxu0 0.0
    %341 = vmatprep.subr.mxu0 0.0
    %342 = vmatpush2.msra.mxu0 0.0
    %343 = vmatprep.subr.mxu0 0.0
    %344 = vmatpush2.msra.mxu0 0.0
    %345 = vmatprep.mubr.f32.mxu0 0.0
    %346 = vmatmul.mubr.f32.gmra.mxu0 %v86
    %v347 = vpop.f32.mrf.mxu0
    %v348 = vadd.f32 0.0, %v347
    %v349 = vpop.f32.mrf.mxu0
    %350 = vdwg.mxu0
    %351 = vmatprep.subr.mxu0 0.0
    %352 = vmatpush1.msra.mxu0 %v264
    %353 = vmatprep.subr.mxu0 0.0
    %354 = vmatpush1.msra.mxu0 %v263
    %355 = vmatprep.subr.mxu0 0.0
    %356 = vmatpush1.msra.mxu0 %v262
    %357 = vmatprep.subr.mxu0 0.0
    %358 = vmatpush1.msra.mxu0 %v261
    %359 = vmatprep.subr.mxu0 0.0
    %360 = vmatpush1.msra.mxu0 %v260
    %361 = vmatprep.subr.mxu0 0.0
    %362 = vmatpush1.msra.mxu0 %v259
    %363 = vmatprep.subr.mxu0 0.0
    %364 = vmatpush1.msra.mxu0 %v258
    %365 = vmatprep.subr.mxu0 0.0
    %366 = vmatpush1.msra.mxu0 %v257
    %367 = vmatprep.subr.mxu0 0.0
    %368 = vmatpush1.msra.mxu0 %v256
    %369 = vmatprep.subr.mxu0 0.0
    %370 = vmatpush1.msra.mxu0 %v255
    %371 = vmatprep.subr.mxu0 0.0
    %372 = vmatpush1.msra.mxu0 %v254
    %373 = vmatprep.subr.mxu0 0.0
    %374 = vmatpush1.msra.mxu0 %v253
    %375 = vmatprep.subr.mxu0 0.0
    %376 = vmatpush1.msra.mxu0 %v252
    %377 = vmatprep.subr.mxu0 0.0
    %378 = vmatpush1.msra.mxu0 %v251
    %379 = vmatprep.subr.mxu0 0.0
    %380 = vmatpush1.msra.mxu0 %v250
    %381 = vmatprep.subr.mxu0 0.0
    %382 = vmatpush1.msra.mxu0 %v249
    %383 = vmatprep.subr.mxu0 0.0
    %384 = vmatpush2.msra.mxu0 0.0
    %385 = vmatprep.subr.mxu0 0.0
    %386 = vmatpush2.msra.mxu0 0.0
    %387 = vmatprep.subr.mxu0 0.0
    %388 = vmatpush2.msra.mxu0 0.0
    %389 = vmatprep.subr.mxu0 0.0
    %390 = vmatpush2.msra.mxu0 0.0
    %391 = vmatprep.subr.mxu0 0.0
    %392 = vmatpush2.msra.mxu0 0.0
    %393 = vmatprep.subr.mxu0 0.0
    %394 = vmatpush2.msra.mxu0 0.0
    %395 = vmatprep.subr.mxu0 0.0
    %396 = vmatpush2.msra.mxu0 0.0
    %397 = vmatprep.subr.mxu0 0.0
    %398 = vmatpush2.msra.mxu0 0.0
    %399 = vmatprep.subr.mxu0 0.0
    %400 = vmatpush2.msra.mxu0 0.0
    %401 = vmatprep.subr.mxu0 0.0
    %402 = vmatpush2.msra.mxu0 0.0
    %403 = vmatprep.subr.mxu0 0.0
    %404 = vmatpush2.msra.mxu0 0.0
    %405 = vmatprep.subr.mxu0 0.0
    %406 = vmatpush2.msra.mxu0 0.0
    %407 = vmatprep.subr.mxu0 0.0
    %408 = vmatpush2.msra.mxu0 0.0
    %409 = vmatprep.subr.mxu0 0.0
    %410 = vmatpush2.msra.mxu0 0.0
    %411 = vmatprep.subr.mxu0 0.0
    %412 = vmatpush2.msra.mxu0 0.0
    %413 = vmatprep.subr.mxu0 0.0
    %414 = vmatpush2.msra.mxu0 0.0
    %415 = vmatprep.mubr.f32.mxu0 0.0
    %416 = vmatmul.mubr.f32.gmra.mxu0 %v86
    %v417 = vpop.f32.mrf.mxu0
    %v418 = vadd.f32 %v167, %v417
    %v419 = vpop.f32.mrf.mxu0
    %420 = vdwg.mxu0
    %v421 = vld [vmem:[#allocation10 + $0x2] sm:$0x1]
    %v422 = vld [vmem:[#allocation10 + $0x3] sm:$0x1]
    %v423 = vsel %vm96, %v418, 0.0
    %424 = vadd.xlane.f32.xlu0 %v423
    %v425 = vpop.xlane.xlu0 %424
    %v426 = vrcp.pop 32.0
    %v427 = vmul.f32 %v425, %v426
    %v428 = vsub.f32 %v418, %v427
    %v429 = vmul.f32 %v428, %v428
    %v430 = vsel %vm96, %v429, 0.0
    %431 = vadd.xlane.f32.xlu0 %v430
    %v432 = vpop.xlane.xlu0 %431
    %v433 = vmul.f32 %v432, %v426
    %v434 = vadd.f32 %v433, 1e-05
    %v435 = vrsqrt.pop %v434
    %v436 = vmul.f32 %v428, %v435
    %v437 = vlaneseq
    %v438 = vshrl.u32 %v437, 7
    %v439 = vsub.s32 0, %v438
    %v440 = vrot.slane %v421, %v439
    %v441 = vmul.f32 %v436, %v440
    %v442 = vlaneseq
    %v443 = vshrl.u32 %v442, 7
    %v444 = vsub.s32 0, %v443
    %v445 = vrot.slane %v422, %v444
    %v446 = vadd.f32 %v441, %v445
    %v447 = vld [vmem:[#allocation8 + $0x40] sm:$0xff]
    %v448 = vld [vmem:[#allocation8 + $0x48] sm:$0xff]
    %v449 = vld [vmem:[#allocation8 + $0x50] sm:$0xff]
    %v450 = vld [vmem:[#allocation8 + $0x58] sm:$0xff]
    %v451 = vld [vmem:[#allocation10 + $0x4] sm:$0x1]
    %v452 = vlaneseq
    %v453 = vshrl.u32 %v452, 7
    %v454 = vsub.s32 0, %v453
    %v455 = vrot.slane %v451, %v454
    %v457 = vsel %vm96, %v446, 0
    %459 = vmatprep.subr.mxu0 0.0
    %460 = vmatpush1.msra.mxu0 0.0
    %461 = vmatprep.subr.mxu0 0.0
    %462 = vmatpush1.msra.mxu0 0.0
    %463 = vmatprep.subr.mxu0 0.0
    %464 = vmatpush1.msra.mxu0 0.0
    %465 = vmatprep.subr.mxu0 0.0
    %466 = vmatpush1.msra.mxu0 0.0
    %467 = vmatprep.subr.mxu0 0.0
    %468 = vmatpush1.msra.mxu0 0.0
    %469 = vmatprep.subr.mxu0 0.0
    %470 = vmatpush1.msra.mxu0 0.0
    %471 = vmatprep.subr.mxu0 0.0
    %472 = vmatpush1.msra.mxu0 0.0
    %473 = vmatprep.subr.mxu0 0.0
    %474 = vmatpush1.msra.mxu0 0.0
    %475 = vmatprep.subr.mxu0 0.0
    %476 = vmatpush1.msra.mxu0 0.0
    %477 = vmatprep.subr.mxu0 0.0
    %478 = vmatpush1.msra.mxu0 0.0
    %479 = vmatprep.subr.mxu0 0.0
    %480 = vmatpush1.msra.mxu0 0.0
    %481 = vmatprep.subr.mxu0 0.0
    %482 = vmatpush1.msra.mxu0 0.0
    %483 = vmatprep.subr.mxu0 0.0
    %484 = vmatpush1.msra.mxu0 %v450
    %485 = vmatprep.subr.mxu0 0.0
    %486 = vmatpush1.msra.mxu0 %v449
    %487 = vmatprep.subr.mxu0 0.0
    %488 = vmatpush1.msra.mxu0 %v448
    %489 = vmatprep.subr.mxu0 0.0
    %490 = vmatpush1.msra.mxu0 %v447
    %491 = vmatprep.subr.mxu0 0.0
    %492 = vmatpush2.msra.mxu0 0.0
    %493 = vmatprep.subr.mxu0 0.0
    %494 = vmatpush2.msra.mxu0 0.0
    %495 = vmatprep.subr.mxu0 0.0
    %496 = vmatpush2.msra.mxu0 0.0
    %497 = vmatprep.subr.mxu0 0.0
    %498 = vmatpush2.msra.mxu0 0.0
    %499 = vmatprep.subr.mxu0 0.0
    %500 = vmatpush2.msra.mxu0 0.0
    %501 = vmatprep.subr.mxu0 0.0
    %502 = vmatpush2.msra.mxu0 0.0
    %503 = vmatprep.subr.mxu0 0.0
    %504 = vmatpush2.msra.mxu0 0.0
    %505 = vmatprep.subr.mxu0 0.0
    %506 = vmatpush2.msra.mxu0 0.0
    %507 = vmatprep.subr.mxu0 0.0
    %508 = vmatpush2.msra.mxu0 0.0
    %509 = vmatprep.subr.mxu0 0.0
    %510 = vmatpush2.msra.mxu0 0.0
    %511 = vmatprep.subr.mxu0 0.0
    %512 = vmatpush2.msra.mxu0 0.0
    %513 = vmatprep.subr.mxu0 0.0
    %514 = vmatpush2.msra.mxu0 0.0
    %515 = vmatprep.subr.mxu0 0.0
    %516 = vmatpush2.msra.mxu0 0.0
    %517 = vmatprep.subr.mxu0 0.0
    %518 = vmatpush2.msra.mxu0 0.0
    %519 = vmatprep.subr.mxu0 0.0
    %520 = vmatpush2.msra.mxu0 0.0
    %521 = vmatprep.subr.mxu0 0.0
    %522 = vmatpush2.msra.mxu0 0.0
    %523 = vmatprep.mubr.f32.mxu0 0.0
    %524 = vmatmul.mubr.f32.gmra.mxu0 %v457
    %v525 = vpop.f32.mrf.mxu0
    %v526 = vadd.f32 %v455, %v525
    %v527 = vpop.f32.mrf.mxu0
    %528 = vdwg.mxu0
    %v529 = vmax.f32 %v526, 0.0
    %v530 = vld [vmem:[#allocation8 + $0x60] sm:$0xff]
    %v531 = vld [vmem:[#allocation8 + $0x68] sm:$0xff]
    %v532 = vld [vmem:[#allocation8 + $0x70] sm:$0xff]
    %v533 = vld [vmem:[#allocation8 + $0x78] sm:$0xff]
    %v534 = vld [vmem:[#allocation8 + $0x80] sm:$0xff]
    %v535 = vld [vmem:[#allocation8 + $0x88] sm:$0xff]
    %v536 = vld [vmem:[#allocation8 + $0x90] sm:$0xff]
    %v537 = vld [vmem:[#allocation8 + $0x98] sm:$0xff]
    %v538 = vld [vmem:[#allocation10 + $0x5] sm:$0x1]
    %v539 = vlaneseq
    %v540 = vshrl.u32 %v539, 7
    %v541 = vsub.s32 0, %v540
    %v542 = vrot.slane %v538, %v541
    %vm543 = vcmask 523264
    %v545 = vsel %vm543, %v529, 0
    %547 = vmatprep.subr.mxu0 0.0
    %548 = vmatpush1.msra.mxu0 0.0
    %549 = vmatprep.subr.mxu0 0.0
    %550 = vmatpush1.msra.mxu0 0.0
    %551 = vmatprep.subr.mxu0 0.0
    %552 = vmatpush1.msra.mxu0 0.0
    %553 = vmatprep.subr.mxu0 0.0
    %554 = vmatpush1.msra.mxu0 0.0
    %555 = vmatprep.subr.mxu0 0.0
    %556 = vmatpush1.msra.mxu0 0.0
    %557 = vmatprep.subr.mxu0 0.0
    %558 = vmatpush1.msra.mxu0 0.0
    %559 = vmatprep.subr.mxu0 0.0
    %560 = vmatpush1.msra.mxu0 0.0
    %561 = vmatprep.subr.mxu0 0.0
    %562 = vmatpush1.msra.mxu0 0.0
    %563 = vmatprep.subr.mxu0 0.0
    %564 = vmatpush1.msra.mxu0 %v537
    %565 = vmatprep.subr.mxu0 0.0
    %566 = vmatpush1.msra.mxu0 %v536
    %567 = vmatprep.subr.mxu0 0.0
    %568 = vmatpush1.msra.mxu0 %v535
    %569 = vmatprep.subr.mxu0 0.0
    %570 = vmatpush1.msra.mxu0 %v534
    %571 = vmatprep.subr.mxu0 0.0
    %572 = vmatpush1.msra.mxu0 %v533
    %573 = vmatprep.subr.mxu0 0.0
    %574 = vmatpush1.msra.mxu0 %v532
    %575 = vmatprep.subr.mxu0 0.0
    %576 = vmatpush1.msra.mxu0 %v531
    %577 = vmatprep.subr.mxu0 0.0
    %578 = vmatpush1.msra.mxu0 %v530
    %579 = vmatprep.subr.mxu0 0.0
    %580 = vmatpush2.msra.mxu0 0.0
    %581 = vmatprep.subr.mxu0 0.0
    %582 = vmatpush2.msra.mxu0 0.0
    %583 = vmatprep.subr.mxu0 0.0
    %584 = vmatpush2.msra.mxu0 0.0
    %585 = vmatprep.subr.mxu0 0.0
    %586 = vmatpush2.msra.mxu0 0.0
    %587 = vmatprep.subr.mxu0 0.0
    %588 = vmatpush2.msra.mxu0 0.0
    %589 = vmatprep.subr.mxu0 0.0
    %590 = vmatpush2.msra.mxu0 0.0
    %591 = vmatprep.subr.mxu0 0.0
    %592 = vmatpush2.msra.mxu0 0.0
    %593 = vmatprep.subr.mxu0 0.0
    %594 = vmatpush2.msra.mxu0 0.0
    %595 = vmatprep.subr.mxu0 0.0
    %596 = vmatpush2.msra.mxu0 0.0
    %597 = vmatprep.subr.mxu0 0.0
    %598 = vmatpush2.msra.mxu0 0.0
    %599 = vmatprep.subr.mxu0 0.0
    %600 = vmatpush2.msra.mxu0 0.0
    %601 = vmatprep.subr.mxu0 0.0
    %602 = vmatpush2.msra.mxu0 0.0
    %603 = vmatprep.subr.mxu0 0.0
    %604 = vmatpush2.msra.mxu0 0.0
    %605 = vmatprep.subr.mxu0 0.0
    %606 = vmatpush2.msra.mxu0 0.0
    %607 = vmatprep.subr.mxu0 0.0
    %608 = vmatpush2.msra.mxu0 0.0
    %609 = vmatprep.subr.mxu0 0.0
    %610 = vmatpush2.msra.mxu0 0.0
    %611 = vmatprep.mubr.f32.mxu0 0.0
    %612 = vmatmul.mubr.f32.gmra.mxu0 %v545
    %v613 = vpop.f32.mrf.mxu0
    %v614 = vadd.f32 %v542, %v613
    %v615 = vpop.f32.mrf.mxu0
    %616 = vdwg.mxu0
    %v617 = vadd.f32 %v446, %v614
    %v618 = vld [vmem:[#allocation10 + $0x6] sm:$0x1]
    %v619 = vld [vmem:[#allocation10 + $0x7] sm:$0x1]
    %v620 = vsel %vm96, %v617, 0.0
    %621 = vadd.xlane.f32.xlu0 %v620
    %v622 = vpop.xlane.xlu0 %621
    %v623 = vmul.f32 %v622, %v426
    %v624 = vsub.f32 %v617, %v623
    %v625 = vmul.f32 %v624, %v624
    %v626 = vsel %vm96, %v625, 0.0
    %627 = vadd.xlane.f32.xlu0 %v626
    %v628 = vpop.xlane.xlu0 %627
    %v629 = vmul.f32 %v628, %v426
    %v630 = vadd.f32 %v629, 1e-05
    %v631 = vrsqrt.pop %v630
    %v632 = vmul.f32 %v624, %v631
    %v633 = vlaneseq
    %v634 = vshrl.u32 %v633, 7
    %v635 = vsub.s32 0, %v634
    %v636 = vrot.slane %v618, %v635
    %v637 = vmul.f32 %v632, %v636
    %v638 = vlaneseq
    %v639 = vshrl.u32 %v638, 7
    %v640 = vsub.s32 0, %v639
    %v641 = vrot.slane %v619, %v640
    %v642 = vadd.f32 %v637, %v641
    %v643 = vadd.f32 %v642, %v246
    %v644 = vld [vmem:[#allocation10 + $0xa] sm:$0x1]
    %v645 = vld [vmem:[#allocation10 + $0xb] sm:$0x1]
    %v646 = vsel %vm96, %v643, 0.0
    %647 = vadd.xlane.f32.xlu0 %v646
    %v648 = vpop.xlane.xlu0 %647
    %v649 = vmul.f32 %v648, %v426
    %v650 = vsub.f32 %v643, %v649
    %v651 = vmul.f32 %v650, %v650
    %v652 = vsel %vm96, %v651, 0.0
    %653 = vadd.xlane.f32.xlu0 %v652
    %v654 = vpop.xlane.xlu0 %653
    %v655 = vmul.f32 %v654, %v426
    %v656 = vadd.f32 %v655, 1e-05
    %v657 = vrsqrt.pop %v656
    %v658 = vmul.f32 %v650, %v657
    %v659 = vlaneseq
    %v660 = vshrl.u32 %v659, 7
    %v661 = vsub.s32 0, %v660
    %v662 = vrot.slane %v644, %v661
    %v663 = vmul.f32 %v658, %v662
    %v664 = vlaneseq
    %v665 = vshrl.u32 %v664, 7
    %v666 = vsub.s32 0, %v665
    %v667 = vrot.slane %v645, %v666
    %v668 = vadd.f32 %v663, %v667
    %v669 = vld [vmem:[#allocation8 + $0xc0] sm:$0xff]
    %v670 = vld [vmem:[#allocation8 + $0xc8] sm:$0xff]
    %v671 = vld [vmem:[#allocation8 + $0xd0] sm:$0xff]
    %v672 = vld [vmem:[#allocation8 + $0xd8] sm:$0xff]
    %v673 = vld [vmem:[#allocation10 + $0xc] sm:$0x1]
    %v674 = vlaneseq
    %v675 = vshrl.u32 %v674, 7
    %v676 = vsub.s32 0, %v675
    %v677 = vrot.slane %v673, %v676
    %v679 = vsel %vm96, %v668, 0
    %681 = vmatprep.subr.mxu0 0.0
    %682 = vmatpush1.msra.mxu0 0.0
    %683 = vmatprep.subr.mxu0 0.0
    %684 = vmatpush1.msra.mxu0 0.0
    %685 = vmatprep.subr.mxu0 0.0
    %686 = vmatpush1.msra.mxu0 0.0
    %687 = vmatprep.subr.mxu0 0.0
    %688 = vmatpush1.msra.mxu0 0.0
    %689 = vmatprep.subr.mxu0 0.0
    %690 = vmatpush1.msra.mxu0 0.0
    %691 = vmatprep.subr.mxu0 0.0
    %692 = vmatpush1.msra.mxu0 0.0
    %693 = vmatprep.subr.mxu0 0.0
    %694 = vmatpush1.msra.mxu0 0.0
    %695 = vmatprep.subr.mxu0 0.0
    %696 = vmatpush1.msra.mxu0 0.0
    %697 = vmatprep.subr.mxu0 0.0
    %698 = vmatpush1.msra.mxu0 0.0
    %699 = vmatprep.subr.mxu0 0.0
    %700 = vmatpush1.msra.mxu0 0.0
    %701 = vmatprep.subr.mxu0 0.0
    %702 = vmatpush1.msra.mxu0 0.0
    %703 = vmatprep.subr.mxu0 0.0
    %704 = vmatpush1.msra.mxu0 0.0
    %705 = vmatprep.subr.mxu0 0.0
    %706 = vmatpush1.msra.mxu0 %v672
    %707 = vmatprep.subr.mxu0 0.0
    %708 = vmatpush1.msra.mxu0 %v671
    %709 = vmatprep.subr.mxu0 0.0
    %710 = vmatpush1.msra.mxu0 %v670
    %711 = vmatprep.subr.mxu0 0.0
    %712 = vmatpush1.msra.mxu0 %v669
    %713 = vmatprep.subr.mxu0 0.0
    %714 = vmatpush2.msra.mxu0 0.0
    %715 = vmatprep.subr.mxu0 0.0
    %716 = vmatpush2.msra.mxu0 0.0
    %717 = vmatprep.subr.mxu0 0.0
    %718 = vmatpush2.msra.mxu0 0.0
    %719 = vmatprep.subr.mxu0 0.0
    %720 = vmatpush2.msra.mxu0 0.0
    %721 = vmatprep.subr.mxu0 0.0
    %722 = vmatpush2.msra.mxu0 0.0
    %723 = vmatprep.subr.mxu0 0.0
    %724 = vmatpush2.msra.mxu0 0.0
    %725 = vmatprep.subr.mxu0 0.0
    %726 = vmatpush2.msra.mxu0 0.0
    %727 = vmatprep.subr.mxu0 0.0
    %728 = vmatpush2.msra.mxu0 0.0
    %729 = vmatprep.subr.mxu0 0.0
    %730 = vmatpush2.msra.mxu0 0.0
    %731 = vmatprep.subr.mxu0 0.0
    %732 = vmatpush2.msra.mxu0 0.0
    %733 = vmatprep.subr.mxu0 0.0
    %734 = vmatpush2.msra.mxu0 0.0
    %735 = vmatprep.subr.mxu0 0.0
    %736 = vmatpush2.msra.mxu0 0.0
    %737 = vmatprep.subr.mxu0 0.0
    %738 = vmatpush2.msra.mxu0 0.0
    %739 = vmatprep.subr.mxu0 0.0
    %740 = vmatpush2.msra.mxu0 0.0
    %741 = vmatprep.subr.mxu0 0.0
    %742 = vmatpush2.msra.mxu0 0.0
    %743 = vmatprep.subr.mxu0 0.0
    %744 = vmatpush2.msra.mxu0 0.0
    %745 = vmatprep.mubr.f32.mxu0 0.0
    %746 = vmatmul.mubr.f32.gmra.mxu0 %v679
    %v747 = vpop.f32.mrf.mxu0
    %v748 = vadd.f32 %v677, %v747
    %v749 = vpop.f32.mrf.mxu0
    %750 = vdwg.mxu0
    %v751 = vmax.f32 %v748, 0.0
    %v752 = vld [vmem:[#allocation8 + $0xe0] sm:$0xff]
    %v753 = vld [vmem:[#allocation8 + $0xe8] sm:$0xff]
    %v754 = vld [vmem:[#allocation8 + $0xf0] sm:$0xff]
    %v755 = vld [vmem:[#allocation8 + $0xf8] sm:$0xff]
    %v756 = vld [vmem:[#allocation8 + $0x100] sm:$0xff]
    %v757 = vld [vmem:[#allocation8 + $0x108] sm:$0xff]
    %v758 = vld [vmem:[#allocation8 + $0x110] sm:$0xff]
    %v759 = vld [vmem:[#allocation8 + $0x118] sm:$0xff]
    %v760 = vld [vmem:[#allocation10 + $0xd] sm:$0x1]
    %v761 = vlaneseq
    %v762 = vshrl.u32 %v761, 7
    %v763 = vsub.s32 0, %v762
    %v764 = vrot.slane %v760, %v763
    %v766 = vsel %vm543, %v751, 0
    %768 = vmatprep.subr.mxu0 0.0
    %769 = vmatpush1.msra.mxu0 0.0
    %770 = vmatprep.subr.mxu0 0.0
    %771 = vmatpush1.msra.mxu0 0.0
    %772 = vmatprep.subr.mxu0 0.0
    %773 = vmatpush1.msra.mxu0 0.0
    %774 = vmatprep.subr.mxu0 0.0
    %775 = vmatpush1.msra.mxu0 0.0
    %776 = vmatprep.subr.mxu0 0.0
    %777 = vmatpush1.msra.mxu0 0.0
    %778 = vmatprep.subr.mxu0 0.0
    %779 = vmatpush1.msra.mxu0 0.0
    %780 = vmatprep.subr.mxu0 0.0
    %781 = vmatpush1.msra.mxu0 0.0
    %782 = vmatprep.subr.mxu0 0.0
    %783 = vmatpush1.msra.mxu0 0.0
    %784 = vmatprep.subr.mxu0 0.0
    %785 = vmatpush1.msra.mxu0 %v759
    %786 = vmatprep.subr.mxu0 0.0
    %787 = vmatpush1.msra.mxu0 %v758
    %788 = vmatprep.subr.mxu0 0.0
    %789 = vmatpush1.msra.mxu0 %v757
    %790 = vmatprep.subr.mxu0 0.0
    %791 = vmatpush1.msra.mxu0 %v756
    %792 = vmatprep.subr.mxu0 0.0
    %793 = vmatpush1.msra.mxu0 %v755
    %794 = vmatprep.subr.mxu0 0.0
    %795 = vmatpush1.msra.mxu0 %v754
    %796 = vmatprep.subr.mxu0 0.0
    %797 = vmatpush1.msra.mxu0 %v753
    %798 = vmatprep.subr.mxu0 0.0
    %799 = vmatpush1.msra.mxu0 %v752
    %800 = vmatprep.subr.mxu0 0.0
    %801 = vmatpush2.msra.mxu0 0.0
    %802 = vmatprep.subr.mxu0 0.0
    %803 = vmatpush2.msra.mxu0 0.0
    %804 = vmatprep.subr.mxu0 0.0
    %805 = vmatpush2.msra.mxu0 0.0
    %806 = vmatprep.subr.mxu0 0.0
    %807 = vmatpush2.msra.mxu0 0.0
    %808 = vmatprep.subr.mxu0 0.0
    %809 = vmatpush2.msra.mxu0 0.0
    %810 = vmatprep.subr.mxu0 0.0
    %811 = vmatpush2.msra.mxu0 0.0
    %812 = vmatprep.subr.mxu0 0.0
    %813 = vmatpush2.msra.mxu0 0.0
    %814 = vmatprep.subr.mxu0 0.0
    %815 = vmatpush2.msra.mxu0 0.0
    %816 = vmatprep.subr.mxu0 0.0
    %817 = vmatpush2.msra.mxu0 0.0
    %818 = vmatprep.subr.mxu0 0.0
    %819 = vmatpush2.msra.mxu0 0.0
    %820 = vmatprep.subr.mxu0 0.0
    %821 = vmatpush2.msra.mxu0 0.0
    %822 = vmatprep.subr.mxu0 0.0
    %823 = vmatpush2.msra.mxu0 0.0
    %824 = vmatprep.subr.mxu0 0.0
    %825 = vmatpush2.msra.mxu0 0.0
    %826 = vmatprep.subr.mxu0 0.0
    %827 = vmatpush2.msra.mxu0 0.0
    %828 = vmatprep.subr.mxu0 0.0
    %829 = vmatpush2.msra.mxu0 0.0
    %830 = vmatprep.subr.mxu0 0.0
    %831 = vmatpush2.msra.mxu0 0.0
    %832 = vmatprep.mubr.f32.mxu0 0.0
    %833 = vmatmul.mubr.f32.gmra.mxu0 %v766
    %v834 = vpop.f32.mrf.mxu0
    %v835 = vadd.f32 %v764, %v834
    %v836 = vpop.f32.mrf.mxu0
    %837 = vdwg.mxu0
    %v838 = vadd.f32 %v668, %v835
    %v839 = vld [vmem:[#allocation10 + $0xe] sm:$0x1]
    %v840 = vld [vmem:[#allocation10 + $0xf] sm:$0x1]
    %v841 = vsel %vm96, %v838, 0.0
    %842 = vadd.xlane.f32.xlu0 %v841
    %v843 = vpop.xlane.xlu0 %842
    %v844 = vmul.f32 %v843, %v426
    %v845 = vsub.f32 %v838, %v844
    %v846 = vmul.f32 %v845, %v845
    %v847 = vsel %vm96, %v846, 0.0
    %848 = vadd.xlane.f32.xlu0 %v847
    %v849 = vpop.xlane.xlu0 %848
    %v850 = vmul.f32 %v849, %v426
    %v851 = vadd.f32 %v850, 1e-05
    %v852 = vrsqrt.pop %v851
    %v853 = vmul.f32 %v845, %v852
    %v854 = vlaneseq
    %v855 = vshrl.u32 %v854, 7
    %v856 = vsub.s32 0, %v855
    %v857 = vrot.slane %v839, %v856
    %v858 = vmul.f32 %v853, %v857
    %v859 = vlaneseq
    %v860 = vshrl.u32 %v859, 7
    %v861 = vsub.s32 0, %v860
    %v862 = vrot.slane %v840, %v861
    %v863 = vadd.f32 %v858, %v862
    %v864 = vld [vmem:[#allocation8] sm:$0xff]
    %v865 = vld [vmem:[#allocation8 + $0x8] sm:$0xff]
    %v866 = vld [vmem:[#allocation8 + $0x10] sm:$0xff]
    %v867 = vld [vmem:[#allocation8 + $0x18] sm:$0xff]
    %v868 = vld [vmem:[#allocation10] sm:$0x1]
    %v869 = vlaneseq
    %v870 = vshrl.u32 %v869, 7
    %v871 = vsub.s32 0, %v870
    %v872 = vrot.slane %v868, %v871
    %v874 = vsel %vm96, %v863, 0
    %876 = vmatprep.subr.mxu0 0.0
    %877 = vmatpush1.msra.mxu0 0.0
    %878 = vmatprep.subr.mxu0 0.0
    %879 = vmatpush1.msra.mxu0 0.0
    %880 = vmatprep.subr.mxu0 0.0
    %881 = vmatpush1.msra.mxu0 0.0
    %882 = vmatprep.subr.mxu0 0.0
    %883 = vmatpush1.msra.mxu0 0.0
    %884 = vmatprep.subr.mxu0 0.0
    %885 = vmatpush1.msra.mxu0 0.0
    %886 = vmatprep.subr.mxu0 0.0
    %887 = vmatpush1.msra.mxu0 0.0
    %888 = vmatprep.subr.mxu0 0.0
    %889 = vmatpush1.msra.mxu0 0.0
    %890 = vmatprep.subr.mxu0 0.0
    %891 = vmatpush1.msra.mxu0 0.0
    %892 = vmatprep.subr.mxu0 0.0
    %893 = vmatpush1.msra.mxu0 0.0
    %894 = vmatprep.subr.mxu0 0.0
    %895 = vmatpush1.msra.mxu0 0.0
    %896 = vmatprep.subr.mxu0 0.0
    %897 = vmatpush1.msra.mxu0 0.0
    %898 = vmatprep.subr.mxu0 0.0
    %899 = vmatpush1.msra.mxu0 0.0
    %900 = vmatprep.subr.mxu0 0.0
    %901 = vmatpush1.msra.mxu0 %v867
    %902 = vmatprep.subr.mxu0 0.0
    %903 = vmatpush1.msra.mxu0 %v866
    %904 = vmatprep.subr.mxu0 0.0
    %905 = vmatpush1.msra.mxu0 %v865
    %906 = vmatprep.subr.mxu0 0.0
    %907 = vmatpush1.msra.mxu0 %v864
    %908 = vmatprep.subr.mxu0 0.0
    %909 = vmatpush2.msra.mxu0 0.0
    %910 = vmatprep.subr.mxu0 0.0
    %911 = vmatpush2.msra.mxu0 0.0
    %912 = vmatprep.subr.mxu0 0.0
    %913 = vmatpush2.msra.mxu0 0.0
    %914 = vmatprep.subr.mxu0 0.0
    %915 = vmatpush2.msra.mxu0 0.0
    %916 = vmatprep.subr.mxu0 0.0
    %917 = vmatpush2.msra.mxu0 0.0
    %918 = vmatprep.subr.mxu0 0.0
    %919 = vmatpush2.msra.mxu0 0.0
    %920 = vmatprep.subr.mxu0 0.0
    %921 = vmatpush2.msra.mxu0 0.0
    %922 = vmatprep.subr.mxu0 0.0
    %923 = vmatpush2.msra.mxu0 0.0
    %924 = vmatprep.subr.mxu0 0.0
    %925 = vmatpush2.msra.mxu0 0.0
    %926 = vmatprep.subr.mxu0 0.0
    %927 = vmatpush2.msra.mxu0 0.0
    %928 = vmatprep.subr.mxu0 0.0
    %929 = vmatpush2.msra.mxu0 0.0
    %930 = vmatprep.subr.mxu0 0.0
    %931 = vmatpush2.msra.mxu0 0.0
    %932 = vmatprep.subr.mxu0 0.0
    %933 = vmatpush2.msra.mxu0 0.0
    %934 = vmatprep.subr.mxu0 0.0
    %935 = vmatpush2.msra.mxu0 0.0
    %936 = vmatprep.subr.mxu0 0.0
    %937 = vmatpush2.msra.mxu0 0.0
    %938 = vmatprep.subr.mxu0 0.0
    %939 = vmatpush2.msra.mxu0 0.0
    %940 = vmatprep.mubr.f32.mxu0 0.0
    %941 = vmatmul.mubr.f32.gmra.mxu0 %v874
    %v942 = vpop.f32.mrf.mxu0
    %v943 = vadd.f32 %v872, %v942
    %v944 = vpop.f32.mrf.mxu0
    %945 = vdwg.mxu0
    %v946 = vadd.f32 %v943, %v348
    %947 = vst [vmem:[#allocation11] sm:$0xff] %v946
    // Predicated region
    $region42: #{tpu_custom_call.1} parent=1 // pred_check
      _
    $region43: #{tpu_custom_call.1} parent=1 // pred_check_branch
      %949 = sbr.rel (0) target = $region45
    $region44: #{tpu_custom_call.1} parent=1 // pred_region
      %s951 = ssub.s32 128, 128
      %952 = vsyncadd [#allocation4], %s951
      %s954 = sshll.u32 [#allocation11], 4
      %s955 = int_to_ptr.vmem [resolvable:$true] %s954
      %957 = dma.vmem_to_hbm [thread:$0]  %s955, 128, %s5, [#allocation4]
    $region45: #{tpu_custom_call.1} parent=1 // pred_fallthru
      _
    // Predicated region
    $region46: #{tpu_custom_call.1} parent=1 // pred_check
      _
    $region47: #{tpu_custom_call.1} parent=1 // pred_check_branch
      %959 = sbr.rel (0) target = $region49
    $region48: #{tpu_custom_call.1} parent=1 // pred_region
      %960 = dma.done [#allocation4], 128
    $region49: #{tpu_custom_call.1} parent=1 // pred_fallthru
      _
    %961 = vsyncpa [#allocation3], 1
    %962 = vsyncpa [#allocation6], 1
    %963 = vsyncpa [#allocation9], 1
    %964 = vsyncpa [#allocation4], 1

</llo_original>
